<compile_context>
chip_gen: v6e
topology: v6e:2x2x1
jax: 0.10.0
libtpu: 0.0.40
codegen_flags: <defaults>
</compile_context>

<pallas_src>
import functools

import jax
import jax.numpy as jnp
from jax.experimental import pallas as pl
from jax.experimental.pallas import tpu as pltpu

LANE = 128


def _round_up(v, m):
    return ((v + m - 1) // m) * m


# -----------------------------------------------------------------------------
# Kernel: whole MLP fused; the grid tiles the batch dimension only.
# -----------------------------------------------------------------------------
def _fcdnn_kernel(no_layers, x_ref, w_in_ref, b_in_ref, *rest):
    if no_layers > 0:
        w_hid_ref, b_hid_ref, w_out_ref, b_out_ref, o_ref = rest
    else:
        w_out_ref, b_out_ref, o_ref = rest

    # Input layer.  x arrives at its real (unpadded) feature width in f32 and
    # is cast to bf16 in VMEM right before the MXU push (no wrapper-side pad).
    x = x_ref[...].astype(jnp.bfloat16)                         # (tile_m, dim_inp)
    acc = jnp.dot(x, w_in_ref[...], preferred_element_type=jnp.float32)
    h = jnp.tanh(acc.astype(jnp.bfloat16) + b_in_ref[...])      # bf16 bias+tanh

    # Hidden layers (stacked weights; small L -> unrolled at trace time).
    # h stays bf16 end-to-end: it is the MXU input dtype of the next layer.
    for i in range(no_layers):
        acc = jnp.dot(h, w_hid_ref[i], preferred_element_type=jnp.float32)
        h = jnp.tanh(acc.astype(jnp.bfloat16) + b_hid_ref[i])

    # Output layer (no activation): f32 accumulate + f32 bias, stored at the
    # (narrow) output dtype -> lane-dense bf16 store, half the HBM bytes.
    out = (jnp.dot(h, w_out_ref[...], preferred_element_type=jnp.float32)
           + b_out_ref[...])
    o_ref[...] = out.astype(o_ref.dtype)


# -----------------------------------------------------------------------------
# One-time parameter packing: pad fan_out dims to 128 lanes, stack the hidden
# layers, cast weights (and input/hidden biases) to bf16.  Zero padding is
# exact: padded hidden channels see zero weights + zero bias -> tanh(0)=0
# forever, and padded output columns are zero and sliced off by the wrapper.
# The input fan_in is NOT padded (x is consumed at its real width).
# -----------------------------------------------------------------------------
def pack_params(params, no_layers):
    dim_inp, dim_hid = params["w_in"].shape
    dim_out = params["w_out"].shape[1]
    dh_p = _round_up(dim_hid, LANE)
    do_p = _round_up(dim_out, LANE)

    def pad2(a, rows, cols):
        out = jnp.zeros((rows, cols), a.dtype)
        return out.at[: a.shape[0], : a.shape[1]].set(a)

    packed = {
        "w_in": pad2(params["w_in"], dim_inp, dh_p).astype(jnp.bfloat16),
        "b_in": pad2(params["b_in"], 1, dh_p).astype(jnp.bfloat16),
        "w_out": pad2(params["w_out"], dh_p, do_p).astype(jnp.bfloat16),
        "b_out": pad2(params["b_out"], 1, do_p),          # f32: output add stays f32
        "dims": (dim_inp, dim_hid, dim_out),
        "padded_dims": (dh_p, do_p),
    }
    if no_layers > 0:
        packed["w_hid"] = jnp.stack(
            [pad2(params[f"w_h{i}"], dh_p, dh_p) for i in range(no_layers)]
        ).astype(jnp.bfloat16)                            # (L, dh_p, dh_p)
        packed["b_hid"] = jnp.stack(
            [pad2(params[f"b_h{i}"], 1, dh_p) for i in range(no_layers)]
        ).astype(jnp.bfloat16)                            # (L, 1, dh_p)
    return packed


def _pick_tile_m(n):
    """Auto batch-tile: tiny batches in one step, large batches with >=8 steps
    (>=4 per v7x TensorCore after the 'parallel' megacore split)."""
    n8 = _round_up(max(n, 1), 8)
    if n8 <= 256:
        return n8
    for t in (512, 256, 128):
        if pl.cdiv(n8, t) >= 8:
            return t
    return 128


def _vmem_limit_bytes(tile_m, dim_inp, dh_p, do_p, no_layers, out_itemsize):
    """Actual resident footprint (with generous headroom), capped below 48 MiB."""
    def slab(rows, cols, itemsize):
        return _round_up(rows, 8) * _round_up(cols, LANE) * itemsize

    weights = (slab(dim_inp, dh_p, 2) + no_layers * slab(dh_p, dh_p, 2)
               + slab(dh_p, do_p, 2)
               + (1 + no_layers) * slab(1, dh_p, 2) + slab(1, do_p, 4))
    io = 2 * slab(tile_m, dim_inp, 4) + 2 * slab(tile_m, do_p, out_itemsize)
    act = 2 * slab(tile_m, dh_p, 4)
    est = 2 * weights + io + act          # x2: weight blocks may be double-buffered
    return int(min(max(4 * est, 4 << 20), 48 << 20))


def _const_index_map(ndim):
    return lambda i: (0,) * ndim


# -----------------------------------------------------------------------------
# Wrapper
# -----------------------------------------------------------------------------
def fcdnn_forward(x, packed, *, no_layers, tile_m=None, out_dtype=jnp.bfloat16):
    """x: (N, dim_inp) float32.  packed: output of pack_params().  Returns f32."""
    N, dim_inp = x.shape
    dim_inp_p, _, dim_out = packed["dims"]
    assert dim_inp == dim_inp_p, "x feature dim does not match packed params"
    dh_p, do_p = packed["padded_dims"]

    if tile_m is None:
        tile_m = _pick_tile_m(N)
    assert tile_m % 8 == 0, "tile_m must be a multiple of 8 (sublane)"

    # Batch padding only (feature dim is left at its real width -> no fat copy).
    n_pad = _round_up(N, tile_m)
    if n_pad != N:
        x = jnp.pad(x, ((0, n_pad - N), (0, 0)))

    param_list = [packed["w_in"], packed["b_in"]]
    if no_layers > 0:
        param_list += [packed["w_hid"], packed["b_hid"]]
    param_list += [packed["w_out"], packed["b_out"]]

    in_specs = [pl.BlockSpec((tile_m, dim_inp), lambda i: (i, 0))]
    in_specs += [pl.BlockSpec(p.shape, _const_index_map(p.ndim)) for p in param_list]

    out_itemsize = jnp.dtype(out_dtype).itemsize
    out_p = pl.pallas_call(
        functools.partial(_fcdnn_kernel, no_layers),
        out_shape=jax.ShapeDtypeStruct((n_pad, do_p), out_dtype),
        grid_spec=pltpu.PrefetchScalarGridSpec(
            num_scalar_prefetch=0,
            grid=(n_pad // tile_m,),
            in_specs=in_specs,
            out_specs=pl.BlockSpec((tile_m, do_p), lambda i: (i, 0)),
        ),
        compiler_params=pltpu.CompilerParams(
            dimension_semantics=("parallel",),
            vmem_limit_bytes=_vmem_limit_bytes(
                tile_m, dim_inp, dh_p, do_p, no_layers, out_itemsize),
        ),
    )(x, *param_list)

    # Strip batch/feature padding and return f32, matching the torch module.
    return out_p[:N, :dim_out].astype(jnp.float32)


# -----------------------------------------------------------------------------
# Deterministic parameter init (xavier_normal weights, zero bias), matching the
# torch __init__ up to RNG stream.  Stored f32, (fan_in, fan_out) layout.
# -----------------------------------------------------------------------------
def init_params(key, dim_inp, dim_hid, dim_out, no_layers):
    def xavier_normal(k, fan_in, fan_out):
        std = (2.0 / (fan_in + fan_out)) ** 0.5
        return std * jax.random.normal(k, (fan_in, fan_out), dtype=jnp.float32)

    keys = jax.random.split(key, no_layers + 2)
    params = {
        "w_in": xavier_normal(keys[0], dim_inp, dim_hid),
        "b_in": jnp.zeros((1, dim_hid), jnp.float32),
        "w_out": xavier_normal(keys[-1], dim_hid, dim_out),
        "b_out": jnp.zeros((1, dim_out), jnp.float32),
    }
    for i in range(no_layers):
        params[f"w_h{i}"] = xavier_normal(keys[i + 1], dim_hid, dim_hid)
        params[f"b_h{i}"] = jnp.zeros((1, dim_hid), jnp.float32)
    return params


# Pure-JAX references.  match_kernel=True mirrors the kernel's precision path
# (bf16 matmul inputs, f32 accumulate, bf16 bias/tanh, bf16 output cast);
# match_kernel=False is the exact f32 torch semantics.
def fcdnn_ref(x, params, no_layers, match_kernel=False):
    if not match_kernel:
        h = jnp.tanh(x @ params["w_in"] + params["b_in"])
        for i in range(no_layers):
            h = jnp.tanh(h @ params[f"w_h{i}"] + params[f"b_h{i}"])
        return h @ params["w_out"] + params["b_out"]

    bf = jnp.bfloat16

    def dense(h, w):
        return jnp.dot(h.astype(bf), w.astype(bf),
                       preferred_element_type=jnp.float32)

    h = jnp.tanh(dense(x, params["w_in"]).astype(bf) + params["b_in"].astype(bf))
    for i in range(no_layers):
        h = jnp.tanh(dense(h, params[f"w_h{i}"]).astype(bf)
                     + params[f"b_h{i}"].astype(bf))
    out = dense(h, params["w_out"]) + params["b_out"]
    return out.astype(bf).astype(jnp.float32)


if __name__ == "__main__":
    # Feature dims follow the module (dim_inp=4, dim_hid=32, dim_out=2); the
    # batch is sized so the auto tile (128) gives 8 "parallel" grid steps.
    dim_inp, dim_hid, dim_out = 4, 32, 2
    no_layers = 2
    N = 1024

    key = jax.random.PRNGKey(0)
    kx, kp = jax.random.split(key)
    x = jax.random.normal(kx, (N, dim_inp), dtype=jnp.float32)
    params = init_params(kp, dim_inp, dim_hid, dim_out, no_layers)
    packed = pack_params(params, no_layers)

    out = fcdnn_forward(x, packed, no_layers=no_layers)
    out = jax.block_until_ready(out)
    assert out.shape == (N, dim_out)

    # Tight check vs a precision-matched (bf16) reference.
    ref_bf16 = fcdnn_ref(x, params, no_layers, match_kernel=True)
    assert jnp.allclose(out, ref_bf16, atol=2e-2, rtol=2e-2), "mismatch (bf16 ref)"
    # Loose check vs the exact f32 torch semantics (bf16 MXU inputs / bf16 tanh
    # / bf16 output introduce ~1e-2-level deviations at these shapes).
    ref_f32 = fcdnn_ref(x, params, no_layers, match_kernel=False)
    assert jnp.allclose(out, ref_f32, atol=6e-2, rtol=6e-2), "mismatch (f32 ref)"

    # TODO(synk): the rff_mapping=True branch (GaussianEncoding random Fourier
    # features input layer) is not implemented; this covers the Linear path.
    print("KERNEL_OK")
</pallas_src>

<mosaic_0001>
module attributes {stable_mosaic.version = 11 : i64} {
  func.func @_fcdnn_kernel(%arg0: i32, %arg1: memref<128x4xf32, #tpu.memory_space<vmem>>, %arg2: memref<4x128xbf16, #tpu.memory_space<vmem>>, %arg3: memref<1x128xbf16, #tpu.memory_space<vmem>>, %arg4: memref<2x128x128xbf16, #tpu.memory_space<vmem>>, %arg5: memref<2x1x128xbf16, #tpu.memory_space<vmem>>, %arg6: memref<128x128xbf16, #tpu.memory_space<vmem>>, %arg7: memref<1x128xf32, #tpu.memory_space<vmem>>, %arg8: memref<128x128xbf16, #tpu.memory_space<vmem>>) attributes {dimension_semantics = [#tpu.dimension_semantics<parallel>], iteration_bounds = array<i64: 8>, scalar_prefetch = 0 : i64, scratch_operands = 0 : i64, tpu.core_type = #tpu.core_type<tc>, window_params = [{transform_indices = @transform_0, window_bounds = array<i64: 128, 4>}, {pipeline_mode = #tpu.pipeline_mode<synchronous>, transform_indices = @transform_1, window_bounds = array<i64: 4, 128>}, {pipeline_mode = #tpu.pipeline_mode<synchronous>, transform_indices = @transform_2, window_bounds = array<i64: 1, 128>}, {pipeline_mode = #tpu.pipeline_mode<synchronous>, transform_indices = @transform_3, window_bounds = array<i64: 2, 128, 128>}, {pipeline_mode = #tpu.pipeline_mode<synchronous>, transform_indices = @transform_4, window_bounds = array<i64: 2, 1, 128>}, {pipeline_mode = #tpu.pipeline_mode<synchronous>, transform_indices = @transform_5, window_bounds = array<i64: 128, 128>}, {pipeline_mode = #tpu.pipeline_mode<synchronous>, transform_indices = @transform_6, window_bounds = array<i64: 1, 128>}, {transform_indices = @transform_7, window_bounds = array<i64: 128, 128>}]} {
    %c0 = arith.constant 0 : index
    %c0_0 = arith.constant 0 : index
    %0 = vector.load %arg1[%c0, %c0_0] : memref<128x4xf32, #tpu.memory_space<vmem>>, vector<128x4xf32>
    %1 = arith.truncf %0 : vector<128x4xf32> to vector<128x4xbf16>
    %c0_1 = arith.constant 0 : index
    %c0_2 = arith.constant 0 : index
    %2 = vector.load %arg2[%c0_1, %c0_2] : memref<4x128xbf16, #tpu.memory_space<vmem>>, vector<4x128xbf16>
    %cst = arith.constant dense<0.000000e+00> : vector<128x128xf32>
    %3 = tpu.matmul %1, %2, %cst {dimension_numbers = #tpu.dot_dimension_numbers<[1], [0], [0], [1], [0, 0, 1, 1], [], []>} : vector<128x4xbf16>, vector<4x128xbf16>, vector<128x128xf32> -> vector<128x128xf32>
    %4 = arith.truncf %3 : vector<128x128xf32> to vector<128x128xbf16>
    %c0_3 = arith.constant 0 : index
    %c0_4 = arith.constant 0 : index
    %5 = vector.load %arg3[%c0_3, %c0_4] : memref<1x128xbf16, #tpu.memory_space<vmem>>, vector<1x128xbf16>
    %6 = vector.broadcast %5 : vector<1x128xbf16> to vector<128x128xbf16>
    %7 = arith.addf %4, %6 : vector<128x128xbf16>
    %8 = math.tanh %7 : vector<128x128xbf16>
    %c0_5 = arith.constant 0 : index
    %c0_6 = arith.constant 0 : index
    %c0_7 = arith.constant 0 : index
    %9 = vector.load %arg4[%c0_5, %c0_6, %c0_7] : memref<2x128x128xbf16, #tpu.memory_space<vmem>>, vector<1x128x128xbf16>
    %10 = vector.shape_cast %9 : vector<1x128x128xbf16> to vector<128x128xbf16>
    %cst_8 = arith.constant dense<0.000000e+00> : vector<128x128xf32>
    %11 = tpu.matmul %8, %10, %cst_8 {dimension_numbers = #tpu.dot_dimension_numbers<[1], [0], [0], [1], [0, 0, 1, 1], [], []>} : vector<128x128xbf16>, vector<128x128xbf16>, vector<128x128xf32> -> vector<128x128xf32>
    %12 = arith.truncf %11 : vector<128x128xf32> to vector<128x128xbf16>
    %c0_9 = arith.constant 0 : index
    %c0_10 = arith.constant 0 : index
    %c0_11 = arith.constant 0 : index
    %13 = vector.load %arg5[%c0_9, %c0_10, %c0_11] : memref<2x1x128xbf16, #tpu.memory_space<vmem>>, vector<1x1x128xbf16>
    %14 = vector.shape_cast %13 : vector<1x1x128xbf16> to vector<1x128xbf16>
    %15 = vector.broadcast %14 : vector<1x128xbf16> to vector<128x128xbf16>
    %16 = arith.addf %12, %15 : vector<128x128xbf16>
    %17 = math.tanh %16 : vector<128x128xbf16>
    %c1 = arith.constant 1 : index
    %c0_12 = arith.constant 0 : index
    %c0_13 = arith.constant 0 : index
    %18 = vector.load %arg4[%c1, %c0_12, %c0_13] : memref<2x128x128xbf16, #tpu.memory_space<vmem>>, vector<1x128x128xbf16>
    %19 = vector.shape_cast %18 : vector<1x128x128xbf16> to vector<128x128xbf16>
    %cst_14 = arith.constant dense<0.000000e+00> : vector<128x128xf32>
    %20 = tpu.matmul %17, %19, %cst_14 {dimension_numbers = #tpu.dot_dimension_numbers<[1], [0], [0], [1], [0, 0, 1, 1], [], []>} : vector<128x128xbf16>, vector<128x128xbf16>, vector<128x128xf32> -> vector<128x128xf32>
    %21 = arith.truncf %20 : vector<128x128xf32> to vector<128x128xbf16>
    %c1_15 = arith.constant 1 : index
    %c0_16 = arith.constant 0 : index
    %c0_17 = arith.constant 0 : index
    %22 = vector.load %arg5[%c1_15, %c0_16, %c0_17] : memref<2x1x128xbf16, #tpu.memory_space<vmem>>, vector<1x1x128xbf16>
    %23 = vector.shape_cast %22 : vector<1x1x128xbf16> to vector<1x128xbf16>
    %24 = vector.broadcast %23 : vector<1x128xbf16> to vector<128x128xbf16>
    %25 = arith.addf %21, %24 : vector<128x128xbf16>
    %26 = math.tanh %25 : vector<128x128xbf16>
    %c0_18 = arith.constant 0 : index
    %c0_19 = arith.constant 0 : index
    %27 = vector.load %arg6[%c0_18, %c0_19] : memref<128x128xbf16, #tpu.memory_space<vmem>>, vector<128x128xbf16>
    %cst_20 = arith.constant dense<0.000000e+00> : vector<128x128xf32>
    %28 = tpu.matmul %26, %27, %cst_20 {dimension_numbers = #tpu.dot_dimension_numbers<[1], [0], [0], [1], [0, 0, 1, 1], [], []>} : vector<128x128xbf16>, vector<128x128xbf16>, vector<128x128xf32> -> vector<128x128xf32>
    %c0_21 = arith.constant 0 : index
    %c0_22 = arith.constant 0 : index
    %29 = vector.load %arg7[%c0_21, %c0_22] : memref<1x128xf32, #tpu.memory_space<vmem>>, vector<1x128xf32>
    %30 = vector.broadcast %29 : vector<1x128xf32> to vector<128x128xf32>
    %31 = arith.addf %28, %30 : vector<128x128xf32>
    %32 = arith.truncf %31 : vector<128x128xf32> to vector<128x128xbf16>
    %c0_23 = arith.constant 0 : index
    %c0_24 = arith.constant 0 : index
    %33 = vector.load %arg8[%c0_23, %c0_24] : memref<128x128xbf16, #tpu.memory_space<vmem>>, vector<128x128xbf16>
    tpu.vector_store %arg8[%c0_23, %c0_24], %32 {strides = array<i32>} : memref<128x128xbf16, #tpu.memory_space<vmem>>, vector<128x128xbf16>,
    return
  }
  func.func @transform_0(%arg0: i32) -> (i32, i32) {
    %c0_i32 = arith.constant 0 : i32
    %c0_i32_0 = arith.constant 0 : i32
    return %arg0, %c0_i32 : i32, i32
  }
  func.func @transform_1(%arg0: i32) -> (i32, i32) {
    %c0_i32 = arith.constant 0 : i32
    %c0_i32_0 = arith.constant 0 : i32
    %c0_i32_1 = arith.constant 0 : i32
    return %c0_i32, %c0_i32_0 : i32, i32
  }
  func.func @transform_2(%arg0: i32) -> (i32, i32) {
    %c0_i32 = arith.constant 0 : i32
    %c0_i32_0 = arith.constant 0 : i32
    %c0_i32_1 = arith.constant 0 : i32
    return %c0_i32, %c0_i32_0 : i32, i32
  }
  func.func @transform_3(%arg0: i32) -> (i32, i32, i32) {
    %c0_i32 = arith.constant 0 : i32
    %c0_i32_0 = arith.constant 0 : i32
    %c0_i32_1 = arith.constant 0 : i32
    %c0_i32_2 = arith.constant 0 : i32
    return %c0_i32, %c0_i32_0, %c0_i32_1 : i32, i32, i32
  }
  func.func @transform_4(%arg0: i32) -> (i32, i32, i32) {
    %c0_i32 = arith.constant 0 : i32
    %c0_i32_0 = arith.constant 0 : i32
    %c0_i32_1 = arith.constant 0 : i32
    %c0_i32_2 = arith.constant 0 : i32
    return %c0_i32, %c0_i32_0, %c0_i32_1 : i32, i32, i32
  }
  func.func @transform_5(%arg0: i32) -> (i32, i32) {
    %c0_i32 = arith.constant 0 : i32
    %c0_i32_0 = arith.constant 0 : i32
    %c0_i32_1 = arith.constant 0 : i32
    return %c0_i32, %c0_i32_0 : i32, i32
  }
  func.func @transform_6(%arg0: i32) -> (i32, i32) {
    %c0_i32 = arith.constant 0 : i32
    %c0_i32_0 = arith.constant 0 : i32
    %c0_i32_1 = arith.constant 0 : i32
    return %c0_i32, %c0_i32_0 : i32, i32
  }
  func.func @transform_7(%arg0: i32) -> (i32, i32) {
    %c0_i32 = arith.constant 0 : i32
    %c0_i32_0 = arith.constant 0 : i32
    return %arg0, %c0_i32 : i32, i32
  }
}

</mosaic_0001>

<llo_original>
// kernel: tpu_custom_call.1
$region0: #{tpu_custom_call.1}
  #allocation0 [shape = 'u32[]', space=smem, size = 0x4, offset = 0x4, fixed_abs, tag = 'smem constant byte address 0x4 - core index']
  #allocation1 [shape = 'u32[144,128]{1,0:T(1,128)}', space=vmem, size = 0x12000, scoped, tag = 'internal scratch']
  %s0 = inlined_call_operand.vmem [shape: f32[1024,4], index: 0, kind: input, shape index: {}]
  %s1 = inlined_call_operand.vmem [shape: bf16[4,128], index: 1, kind: input, shape index: {}]
  %s2 = inlined_call_operand.vmem [shape: bf16[1,128], index: 2, kind: input, shape index: {}]
  %s3 = inlined_call_operand.vmem [shape: bf16[2,128,128], index: 3, kind: input, shape index: {}]
  %s4 = inlined_call_operand.vmem [shape: bf16[2,1,128], index: 4, kind: input, shape index: {}]
  %s5 = inlined_call_operand.vmem [shape: bf16[128,128], index: 5, kind: input, shape index: {}]
  %s6 = inlined_call_operand.vmem [shape: f32[1,128], index: 6, kind: input, shape index: {}]
  %s7 = inlined_call_operand.hbm [shape: bf16[1024,128], index: 7, kind: output, shape index: {}]
  %s8 = sld [smem:[#allocation0]]
  $region61: #{tpu_custom_call.1} parent=0
    _
  %s10 = ssub.s32 1, %s8
  %s11 = scalar_select 0, %s10, %s8
  $region1: #{tpu_custom_call.1} parent=0
    #allocation2 [shape = 'u8[65536]{0}', space=vmem, size = 0x10000, scoped, tag = 'output window, operand 0']
    #allocation3 [shape = 's32[2]{0}', space=sflag, size = 0x8, scoped, tag = 'scoped memory for tpu_custom_call.1']
    %12 = vsyncpa [#allocation3], 0
    %s13 = scalar_lea.sflag [#allocation3], 1
    %14 = vsyncpa %s13, 0
    loop: start=0, step=1, limit=10
    $region2: #{tpu_custom_call.1} parent=1 // loop_pre_header
      _
    $region3: #{tpu_custom_call.1} parent=1 // loop_header
      %s16 = sphi 0, %s20
      %p17 = scmp.ge.s32.totalorder %s16, 10
      %s26 = sphi 0, %s28
      %s29 = sphi 0, %s26
      %s30 = sphi 0, %s29
      %s46 = sphi 0, %s30
      %s50 = sphi 0, %s50
      %s52 = sphi 0, %s50
      %s53 = sphi 0, %s52
      %s67 = sphi 0, %s53
      %s71 = sphi 0, %s71
      %s73 = sphi 0, %s71
      %s74 = sphi 0, %s73
      %s88 = sphi 0, %s74
      %s92 = sphi 0, %s92
      %s94 = sphi 0, %s92
      %s95 = sphi 0, %s94
      %s109 = sphi 0, %s95
      %s113 = sphi 0, %s113
      %s115 = sphi 0, %s113
      %s116 = sphi 0, %s115
      %s130 = sphi 0, %s116
      %s134 = sphi 0, %s134
      %s136 = sphi 0, %s134
      %s137 = sphi 0, %s136
      %s151 = sphi 0, %s137
      %s155 = sphi 0, %s155
      %s157 = sphi 0, %s155
      %s158 = sphi 0, %s157
      %s172 = sphi 0, %s158
      %s178 = sphi 0, %s180
      %s181 = sphi 0, %s178
      %s182 = sphi 0, %s181
      %s198 = sphi 0, %s182
    $region4: #{tpu_custom_call.1} parent=1 // loop_header_branch
      %19 = sbr.rel (%p17) target = $region8
    $region5: #{tpu_custom_call.1} parent=1 // loop_body
      %s21 = ssub.s32 %s16, 1
      %s22 = ssub.s32 %s16, 2
      %s23 = sadd.s32 %s16, 1
      %s24 = ssub.s32 %s16, %s23
      %p25 = scmp.eq.s32.totalorder %s24, 0
      %s27 = sadd.s32 %s26, 1
      %s28 = scalar_select %p25, %s26, %s27
      %p31 = pneg %p25
      %p32 = scmp.eq.s32.totalorder %s16, 7
      %p33 = por %p31, %p32
      %p34 = scmp.ne.s32.totalorder %s26, %s29
      %p35 = scmp.eq.s32.totalorder %s16, 0
      %p36 = por %p34, %p35
      %p37 = scmp.ne.s32.totalorder %s26, %s29
      %p38 = scmp.eq.s32.totalorder %s21, 7
      %p39 = por %p37, %p38
      %p40 = scmp.ne.s32.totalorder %s29, %s30
      %p41 = scmp.eq.s32.totalorder %s21, 0
      %p42 = por %p40, %p41
      %p43 = scmp.ne.s32.totalorder %s29, %s30
      %p44 = scmp.eq.s32.totalorder %s22, 7
      %p45 = por %p43, %p44
      %p47 = scmp.ne.s32.totalorder %s30, %s46
      %p48 = scmp.eq.s32.totalorder %s22, 0
      %p49 = por %p47, %p48
      %s51 = sadd.s32 %s50, 1
      %p54 = scmp.eq.s32.totalorder %s16, 7
      %p55 = scmp.ne.s32.totalorder %s50, %s52
      %p56 = scmp.eq.s32.totalorder %s16, 0
      %p57 = por %p55, %p56
      %p58 = scmp.ne.s32.totalorder %s50, %s52
      %p59 = scmp.eq.s32.totalorder %s21, 7
      %p60 = por %p58, %p59
      %p61 = scmp.ne.s32.totalorder %s52, %s53
      %p62 = scmp.eq.s32.totalorder %s21, 0
      %p63 = por %p61, %p62
      %p64 = scmp.ne.s32.totalorder %s52, %s53
      %p65 = scmp.eq.s32.totalorder %s22, 7
      %p66 = por %p64, %p65
      %p68 = scmp.ne.s32.totalorder %s53, %s67
      %p69 = scmp.eq.s32.totalorder %s22, 0
      %p70 = por %p68, %p69
      %s72 = sadd.s32 %s71, 1
      %p75 = scmp.eq.s32.totalorder %s16, 7
      %p76 = scmp.ne.s32.totalorder %s71, %s73
      %p77 = scmp.eq.s32.totalorder %s16, 0
      %p78 = por %p76, %p77
      %p79 = scmp.ne.s32.totalorder %s71, %s73
      %p80 = scmp.eq.s32.totalorder %s21, 7
      %p81 = por %p79, %p80
      %p82 = scmp.ne.s32.totalorder %s73, %s74
      %p83 = scmp.eq.s32.totalorder %s21, 0
      %p84 = por %p82, %p83
      %p85 = scmp.ne.s32.totalorder %s73, %s74
      %p86 = scmp.eq.s32.totalorder %s22, 7
      %p87 = por %p85, %p86
      %p89 = scmp.ne.s32.totalorder %s74, %s88
      %p90 = scmp.eq.s32.totalorder %s22, 0
      %p91 = por %p89, %p90
      %s93 = sadd.s32 %s92, 1
      %p96 = scmp.eq.s32.totalorder %s16, 7
      %p97 = scmp.ne.s32.totalorder %s92, %s94
      %p98 = scmp.eq.s32.totalorder %s16, 0
      %p99 = por %p97, %p98
      %p100 = scmp.ne.s32.totalorder %s92, %s94
      %p101 = scmp.eq.s32.totalorder %s21, 7
      %p102 = por %p100, %p101
      %p103 = scmp.ne.s32.totalorder %s94, %s95
      %p104 = scmp.eq.s32.totalorder %s21, 0
      %p105 = por %p103, %p104
      %p106 = scmp.ne.s32.totalorder %s94, %s95
      %p107 = scmp.eq.s32.totalorder %s22, 7
      %p108 = por %p106, %p107
      %p110 = scmp.ne.s32.totalorder %s95, %s109
      %p111 = scmp.eq.s32.totalorder %s22, 0
      %p112 = por %p110, %p111
      %s114 = sadd.s32 %s113, 1
      %p117 = scmp.eq.s32.totalorder %s16, 7
      %p118 = scmp.ne.s32.totalorder %s113, %s115
      %p119 = scmp.eq.s32.totalorder %s16, 0
      %p120 = por %p118, %p119
      %p121 = scmp.ne.s32.totalorder %s113, %s115
      %p122 = scmp.eq.s32.totalorder %s21, 7
      %p123 = por %p121, %p122
      %p124 = scmp.ne.s32.totalorder %s115, %s116
      %p125 = scmp.eq.s32.totalorder %s21, 0
      %p126 = por %p124, %p125
      %p127 = scmp.ne.s32.totalorder %s115, %s116
      %p128 = scmp.eq.s32.totalorder %s22, 7
      %p129 = por %p127, %p128
      %p131 = scmp.ne.s32.totalorder %s116, %s130
      %p132 = scmp.eq.s32.totalorder %s22, 0
      %p133 = por %p131, %p132
      %s135 = sadd.s32 %s134, 1
      %p138 = scmp.eq.s32.totalorder %s16, 7
      %p139 = scmp.ne.s32.totalorder %s134, %s136
      %p140 = scmp.eq.s32.totalorder %s16, 0
      %p141 = por %p139, %p140
      %p142 = scmp.ne.s32.totalorder %s134, %s136
      %p143 = scmp.eq.s32.totalorder %s21, 7
      %p144 = por %p142, %p143
      %p145 = scmp.ne.s32.totalorder %s136, %s137
      %p146 = scmp.eq.s32.totalorder %s21, 0
      %p147 = por %p145, %p146
      %p148 = scmp.ne.s32.totalorder %s136, %s137
      %p149 = scmp.eq.s32.totalorder %s22, 7
      %p150 = por %p148, %p149
      %p152 = scmp.ne.s32.totalorder %s137, %s151
      %p153 = scmp.eq.s32.totalorder %s22, 0
      %p154 = por %p152, %p153
      %s156 = sadd.s32 %s155, 1
      %p159 = scmp.eq.s32.totalorder %s16, 7
      %p160 = scmp.ne.s32.totalorder %s155, %s157
      %p161 = scmp.eq.s32.totalorder %s16, 0
      %p162 = por %p160, %p161
      %p163 = scmp.ne.s32.totalorder %s155, %s157
      %p164 = scmp.eq.s32.totalorder %s21, 7
      %p165 = por %p163, %p164
      %p166 = scmp.ne.s32.totalorder %s157, %s158
      %p167 = scmp.eq.s32.totalorder %s21, 0
      %p168 = por %p166, %p167
      %p169 = scmp.ne.s32.totalorder %s157, %s158
      %p170 = scmp.eq.s32.totalorder %s22, 7
      %p171 = por %p169, %p170
      %p173 = scmp.ne.s32.totalorder %s158, %s172
      %p174 = scmp.eq.s32.totalorder %s22, 0
      %p175 = por %p173, %p174
      %s176 = ssub.s32 %s16, %s23
      %p177 = scmp.eq.s32.totalorder %s176, 0
      %s179 = sadd.s32 %s178, 1
      %s180 = scalar_select %p177, %s178, %s179
      %p183 = pneg %p177
      %p184 = scmp.eq.s32.totalorder %s16, 7
      %p185 = por %p183, %p184
      %p186 = scmp.ne.s32.totalorder %s178, %s181
      %p187 = scmp.eq.s32.totalorder %s16, 0
      %p188 = por %p186, %p187
      %p189 = scmp.ne.s32.totalorder %s178, %s181
      %p190 = scmp.eq.s32.totalorder %s21, 7
      %p191 = por %p189, %p190
      %p192 = scmp.ne.s32.totalorder %s181, %s182
      %p193 = scmp.eq.s32.totalorder %s21, 0
      %p194 = por %p192, %p193
      %p195 = scmp.ne.s32.totalorder %s181, %s182
      %p196 = scmp.eq.s32.totalorder %s22, 7
      %p197 = por %p195, %p196
      %p199 = scmp.ne.s32.totalorder %s182, %s198
      %p200 = scmp.eq.s32.totalorder %s22, 0
      %p201 = por %p199, %p200
      %p202 = scmp.le.s32.totalorder 1, %s16
      %p203 = scmp.lt.s32.totalorder %s16, 9
      %p204 = pnand %p202, %p203
      %p205 = pneg %p204
      // Predicated region
      $region9: #{tpu_custom_call.1} parent=5 // pred_check
        _
      $region10: #{tpu_custom_call.1} parent=5 // pred_check_branch
        %207 = sbr.rel (%p204) target = $region12
      $region11: #{tpu_custom_call.1} parent=5 // pred_region
        %s208 = ssub.s32 %s16, 1
        // Predicated region
        $region13: #{tpu_custom_call.1} parent=11 // pred_check
          %p209 = pneg %p63
        $region14: #{tpu_custom_call.1} parent=11 // pred_check_branch
          %211 = sbr.rel (%p209) target = $region16
        $region15: #{tpu_custom_call.1} parent=11 // pred_region
          _
        $region16: #{tpu_custom_call.1} parent=11 // pred_fallthru
          _
        // Predicated region
        $region17: #{tpu_custom_call.1} parent=11 // pred_check
          %p212 = pneg %p84
        $region18: #{tpu_custom_call.1} parent=11 // pred_check_branch
          %214 = sbr.rel (%p212) target = $region20
        $region19: #{tpu_custom_call.1} parent=11 // pred_region
          _
        $region20: #{tpu_custom_call.1} parent=11 // pred_fallthru
          _
        // Predicated region
        $region21: #{tpu_custom_call.1} parent=11 // pred_check
          %p215 = pneg %p105
        $region22: #{tpu_custom_call.1} parent=11 // pred_check_branch
          %217 = sbr.rel (%p215) target = $region24
        $region23: #{tpu_custom_call.1} parent=11 // pred_region
          _
        $region24: #{tpu_custom_call.1} parent=11 // pred_fallthru
          _
        // Predicated region
        $region25: #{tpu_custom_call.1} parent=11 // pred_check
          %p218 = pneg %p126
        $region26: #{tpu_custom_call.1} parent=11 // pred_check_branch
          %220 = sbr.rel (%p218) target = $region28
        $region27: #{tpu_custom_call.1} parent=11 // pred_region
          _
        $region28: #{tpu_custom_call.1} parent=11 // pred_fallthru
          _
        // Predicated region
        $region29: #{tpu_custom_call.1} parent=11 // pred_check
          %p221 = pneg %p147
        $region30: #{tpu_custom_call.1} parent=11 // pred_check_branch
          %223 = sbr.rel (%p221) target = $region32
        $region31: #{tpu_custom_call.1} parent=11 // pred_region
          _
        $region32: #{tpu_custom_call.1} parent=11 // pred_fallthru
          _
        // Predicated region
        $region33: #{tpu_custom_call.1} parent=11 // pred_check
          %p224 = pneg %p168
        $region34: #{tpu_custom_call.1} parent=11 // pred_check_branch
          %226 = sbr.rel (%p224) target = $region36
        $region35: #{tpu_custom_call.1} parent=11 // pred_region
          _
        $region36: #{tpu_custom_call.1} parent=11 // pred_fallthru
          _
      $region12: #{tpu_custom_call.1} parent=5 // pred_fallthru
        _
      %p227 = scmp.lt.s32.totalorder %s16, 8
      // Predicated region
      $region37: #{tpu_custom_call.1} parent=5 // pred_check
        %p228 = pneg %p227
      $region38: #{tpu_custom_call.1} parent=5 // pred_check_branch
        %230 = sbr.rel (%p228) target = $region40
      $region39: #{tpu_custom_call.1} parent=5 // pred_region
        // Predicated region
        $region41: #{tpu_custom_call.1} parent=39 // pred_check
          %p231 = pneg %p36
        $region42: #{tpu_custom_call.1} parent=39 // pred_check_branch
          %233 = sbr.rel (%p231) target = $region44
        $region43: #{tpu_custom_call.1} parent=39 // pred_region
          %s234 = smul.u32 16, %s16
          %p235 = scmp.lt.s32.totalorder %s234, 127
          %s236 = scalar_select %p235, %s234, 127
          %s237 = smul.addr %s236, 8
          %s238 = scalar_lea.vmem %s0, %s237
          %s239 = smul.u32 16, %s16
        $region44: #{tpu_custom_call.1} parent=39 // pred_fallthru
          _
      $region40: #{tpu_custom_call.1} parent=5 // pred_fallthru
        _
      %p240 = scmp.le.s32.totalorder 1, %s16
      %p241 = scmp.lt.s32.totalorder %s16, 9
      %p242 = pnand %p240, %p241
      %p243 = pneg %p242
      // Predicated region
      $region45: #{tpu_custom_call.1} parent=5 // pred_check
        _
      $region46: #{tpu_custom_call.1} parent=5 // pred_check_branch
        %245 = sbr.rel (%p242) target = $region48
      $region47: #{tpu_custom_call.1} parent=5 // pred_region
        %s246 = ssub.s32 %s16, 1
        %s247 = smul.u32 16, %s21
        %p248 = scmp.lt.s32.totalorder %s247, 127
        %s249 = scalar_select %p248, %s247, 127
        %s250 = smul.addr %s249, 8
        %s251 = scalar_lea.vmem %s0, %s250
        %p252 = pneg %p42
        %p253 = pneg %p39
        %p254 = pneg %p63
        %p255 = pneg %p60
        %p256 = pneg %p84
        %p257 = pneg %p81
        %p258 = pneg %p105
        %p259 = pneg %p102
        %p260 = pneg %p126
        %p261 = pneg %p123
        %p262 = pneg %p147
        %p263 = pneg %p144
        %p264 = pneg %p168
        %p265 = pneg %p165
        %p266 = pneg %p194
        %p267 = pneg %p191
        %s268 = sand.u32 %s181, 1
        %s269 = scalar_lea.sflag [#allocation3], %s268
        %s270 = sand.u32 %s181, 1
        %s271 = smul.addr %s270, 64
        %s272 = scalar_lea.vmem [#allocation2], %s271
        %s273 = smul.u32 16, %s21
        %p274 = scmp.lt.s32.totalorder %s273, 127
        %s275 = scalar_select %p274, %s273, 127
        %s276 = smul.addr %s275, 8
        %s277 = scalar_lea.vmem %s0, %s276
        %s278 = smul.u32 16, %s21
        %s279 = smul.u32 16, %s21
        %v281 = vld [vmem:[%s277] sm:$0xff]
        %v282 = vld [vmem:[%s277 + $0x8] sm:$0xff]
        %v283 = vld [vmem:[%s277 + $0x10] sm:$0xff]
        %v284 = vld [vmem:[%s277 + $0x18] sm:$0xff]
        %v285 = vld [vmem:[%s277 + $0x20] sm:$0xff]
        %v286 = vld [vmem:[%s277 + $0x28] sm:$0xff]
        %v287 = vld [vmem:[%s277 + $0x30] sm:$0xff]
        %v288 = vld [vmem:[%s277 + $0x38] sm:$0xff]
        %v289 = vld [vmem:[%s277 + $0x40] sm:$0xff]
        %v290 = vld [vmem:[%s277 + $0x48] sm:$0xff]
        %v291 = vld [vmem:[%s277 + $0x50] sm:$0xff]
        %v292 = vld [vmem:[%s277 + $0x58] sm:$0xff]
        %v293 = vld [vmem:[%s277 + $0x60] sm:$0xff]
        %v294 = vld [vmem:[%s277 + $0x68] sm:$0xff]
        %v295 = vld [vmem:[%s277 + $0x70] sm:$0xff]
        %v296 = vld [vmem:[%s277 + $0x78] sm:$0xff]
        %v297 = vpack.c.bf16 %v282, %v281
        %v298 = vpack.c.bf16 %v284, %v283
        %v299 = vpack.c.bf16 %v286, %v285
        %v300 = vpack.c.bf16 %v288, %v287
        %v301 = vpack.c.bf16 %v290, %v289
        %v302 = vpack.c.bf16 %v292, %v291
        %v303 = vpack.c.bf16 %v294, %v293
        %v304 = vpack.c.bf16 %v296, %v295
        %v305 = vld [vmem:[%s1] sm:$0x3]
        %vm306 = vcmask 31744
        %v308 = vsel %vm306, %v297, 0
        %v311 = vsel %vm306, %v298, 0
        %v314 = vsel %vm306, %v299, 0
        %v317 = vsel %vm306, %v300, 0
        %v320 = vsel %vm306, %v301, 0
        %v323 = vsel %vm306, %v302, 0
        %v326 = vsel %vm306, %v303, 0
        %v329 = vsel %vm306, %v304, 0
        %vm331 = vcmask 1041408
        %v333 = vsel %vm331, %v305, 0
        %335 = vmatprep.subr.bf16.mxu0 0
        %336 = vmatpush1.bf16.msra.mxu0 0
        %337 = vmatprep.subr.bf16.mxu0 0
        %338 = vmatpush1.bf16.msra.mxu0 0
        %339 = vmatprep.subr.bf16.mxu0 0
        %340 = vmatpush1.bf16.msra.mxu0 0
        %341 = vmatprep.subr.bf16.mxu0 0
        %342 = vmatpush1.bf16.msra.mxu0 0
        %343 = vmatprep.subr.bf16.mxu0 0
        %344 = vmatpush1.bf16.msra.mxu0 0
        %345 = vmatprep.subr.bf16.mxu0 0
        %346 = vmatpush1.bf16.msra.mxu0 0
        %347 = vmatprep.subr.bf16.mxu0 0
        %348 = vmatpush1.bf16.msra.mxu0 0
        %349 = vmatprep.subr.bf16.mxu0 0
        %350 = vmatpush1.bf16.msra.mxu0 %v333
        %351 = vmatprep.subr.bf16.mxu0 0
        %352 = vmatpush2.bf16.msra.mxu0 0
        %353 = vmatprep.subr.bf16.mxu0 0
        %354 = vmatpush2.bf16.msra.mxu0 0
        %355 = vmatprep.subr.bf16.mxu0 0
        %356 = vmatpush2.bf16.msra.mxu0 0
        %357 = vmatprep.subr.bf16.mxu0 0
        %358 = vmatpush2.bf16.msra.mxu0 0
        %359 = vmatprep.subr.bf16.mxu0 0
        %360 = vmatpush2.bf16.msra.mxu0 0
        %361 = vmatprep.subr.bf16.mxu0 0
        %362 = vmatpush2.bf16.msra.mxu0 0
        %363 = vmatprep.subr.bf16.mxu0 0
        %364 = vmatpush2.bf16.msra.mxu0 0
        %365 = vmatprep.subr.bf16.mxu0 0
        %366 = vmatpush2.bf16.msra.mxu0 0
        %367 = vmatprep.mubr.bf16.mxu0 0
        %368 = vmatmul.mubr.bf16.gmra.mxu0 %v308
        %v369 = vpop.f32.mrf.mxu0
        %v370 = vadd.f32 0.0, %v369
        %v371 = vpop.f32.mrf.mxu0
        %v372 = vpop.f32.mrf.mxu0
        %v373 = vadd.f32 0.0, %v372
        %v374 = vpop.f32.mrf.mxu0
        %375 = vmatprep.mubr.bf16.mxu0 0
        %376 = vmatmul.mubr.bf16.gmra.mxu0 %v311
        %v377 = vpop.f32.mrf.mxu0
        %v378 = vadd.f32 0.0, %v377
        %v379 = vpop.f32.mrf.mxu0
        %v380 = vpop.f32.mrf.mxu0
        %v381 = vadd.f32 0.0, %v380
        %v382 = vpop.f32.mrf.mxu0
        %383 = vmatprep.mubr.bf16.mxu0 0
        %384 = vmatmul.mubr.bf16.gmra.mxu0 %v314
        %v385 = vpop.f32.mrf.mxu0
        %v386 = vadd.f32 0.0, %v385
        %v387 = vpop.f32.mrf.mxu0
        %v388 = vpop.f32.mrf.mxu0
        %v389 = vadd.f32 0.0, %v388
        %v390 = vpop.f32.mrf.mxu0
        %391 = vmatprep.mubr.bf16.mxu0 0
        %392 = vmatmul.mubr.bf16.gmra.mxu0 %v317
        %v393 = vpop.f32.mrf.mxu0
        %v394 = vadd.f32 0.0, %v393
        %v395 = vpop.f32.mrf.mxu0
        %v396 = vpop.f32.mrf.mxu0
        %v397 = vadd.f32 0.0, %v396
        %v398 = vpop.f32.mrf.mxu0
        %399 = vmatprep.mubr.bf16.mxu0 0
        %400 = vmatmul.mubr.bf16.gmra.mxu0 %v320
        %v401 = vpop.f32.mrf.mxu0
        %v402 = vadd.f32 0.0, %v401
        %v403 = vpop.f32.mrf.mxu0
        %v404 = vpop.f32.mrf.mxu0
        %v405 = vadd.f32 0.0, %v404
        %v406 = vpop.f32.mrf.mxu0
        %407 = vmatprep.mubr.bf16.mxu0 0
        %408 = vmatmul.mubr.bf16.gmra.mxu0 %v323
        %v409 = vpop.f32.mrf.mxu0
        %v410 = vadd.f32 0.0, %v409
        %v411 = vpop.f32.mrf.mxu0
        %v412 = vpop.f32.mrf.mxu0
        %v413 = vadd.f32 0.0, %v412
        %v414 = vpop.f32.mrf.mxu0
        %415 = vmatprep.mubr.bf16.mxu0 0
        %416 = vmatmul.mubr.bf16.gmra.mxu0 %v326
        %v417 = vpop.f32.mrf.mxu0
        %v418 = vadd.f32 0.0, %v417
        %v419 = vpop.f32.mrf.mxu0
        %v420 = vpop.f32.mrf.mxu0
        %v421 = vadd.f32 0.0, %v420
        %v422 = vpop.f32.mrf.mxu0
        %423 = vmatprep.mubr.bf16.mxu0 0
        %424 = vmatmul.mubr.bf16.gmra.mxu0 %v329
        %v425 = vpop.f32.mrf.mxu0
        %v426 = vadd.f32 0.0, %v425
        %v427 = vpop.f32.mrf.mxu0
        %v428 = vpop.f32.mrf.mxu0
        %v429 = vadd.f32 0.0, %v428
        %v430 = vpop.f32.mrf.mxu0
        %431 = vdwg.mxu0
        %v432 = vpack.c.bf16 %v373, %v370
        %v433 = vpack.c.bf16 %v381, %v378
        %v434 = vpack.c.bf16 %v389, %v386
        %v435 = vpack.c.bf16 %v397, %v394
        %v436 = vpack.c.bf16 %v405, %v402
        %v437 = vpack.c.bf16 %v413, %v410
        %v438 = vpack.c.bf16 %v421, %v418
        %v439 = vpack.c.bf16 %v429, %v426
        %v440 = vld [vmem:[%s2] sm:$0x1]
        %v442 = vpack.i.b16 %v440, %v440
        %v444 = vlaneseq
        %v445 = vshrl.u32 %v444, 7
        %v446 = vsub.s32 0, %v445
        %v447 = vrot.slane %v442, %v446
        %v448 = vadd.bf16 %v432, %v447
        %v449 = vadd.bf16 %v433, %v447
        %v450 = vadd.bf16 %v434, %v447
        %v451 = vadd.bf16 %v435, %v447
        %v452 = vadd.bf16 %v436, %v447
        %v453 = vadd.bf16 %v437, %v447
        %v454 = vadd.bf16 %v438, %v447
        %v455 = vadd.bf16 %v439, %v447
        %v456 = vtanh.bf16.pop %v448
        %v457 = vtanh.bf16.pop %v449
        %v458 = vtanh.bf16.pop %v450
        %v459 = vtanh.bf16.pop %v451
        %v460 = vtanh.bf16.pop %v452
        %v461 = vtanh.bf16.pop %v453
        %v462 = vtanh.bf16.pop %v454
        %v463 = vtanh.bf16.pop %v455
        %v464 = vld [vmem:[%s3] sm:$0xf]
        %v465 = vld [vmem:[%s3 + $0x4] sm:$0xf]
        %v466 = vld [vmem:[%s3 + $0x8] sm:$0xf]
        %v467 = vld [vmem:[%s3 + $0xc] sm:$0xf]
        %v468 = vld [vmem:[%s3 + $0x10] sm:$0xf]
        %v469 = vld [vmem:[%s3 + $0x14] sm:$0xf]
        %v470 = vld [vmem:[%s3 + $0x18] sm:$0xf]
        %v471 = vld [vmem:[%s3 + $0x1c] sm:$0xf]
        %v472 = vld [vmem:[%s3 + $0x20] sm:$0xf]
        %v473 = vld [vmem:[%s3 + $0x24] sm:$0xf]
        %v474 = vld [vmem:[%s3 + $0x28] sm:$0xf]
        %v475 = vld [vmem:[%s3 + $0x2c] sm:$0xf]
        %v476 = vld [vmem:[%s3 + $0x30] sm:$0xf]
        %v477 = vld [vmem:[%s3 + $0x34] sm:$0xf]
        %v478 = vld [vmem:[%s3 + $0x38] sm:$0xf]
        %v479 = vld [vmem:[%s3 + $0x3c] sm:$0xf]
        %v496 = vunpack.c.l.b16 %v464
        %v497 = vunpack.c.l.b16 %v465
        %v498 = vunpack.c.l.b16 %v466
        %v499 = vunpack.c.l.b16 %v467
        %v500 = vunpack.c.l.b16 %v468
        %v501 = vunpack.c.l.b16 %v469
        %v502 = vunpack.c.l.b16 %v470
        %v503 = vunpack.c.l.b16 %v471
        %v504 = vunpack.c.l.b16 %v472
        %v505 = vunpack.c.l.b16 %v473
        %v506 = vunpack.c.l.b16 %v474
        %v507 = vunpack.c.l.b16 %v475
        %v508 = vunpack.c.l.b16 %v476
        %v509 = vunpack.c.l.b16 %v477
        %v510 = vunpack.c.l.b16 %v478
        %v511 = vunpack.c.l.b16 %v479
        %v512 = vpack.c.b16 %v497, %v496
        %v513 = vpack.c.b16 %v499, %v498
        %v514 = vpack.c.b16 %v501, %v500
        %v515 = vpack.c.b16 %v503, %v502
        %v516 = vpack.c.b16 %v505, %v504
        %v517 = vpack.c.b16 %v507, %v506
        %v518 = vpack.c.b16 %v509, %v508
        %v519 = vpack.c.b16 %v511, %v510
        %528 = vmatprep.subr.bf16.mxu0 0
        %529 = vmatpush1.bf16.msra.mxu0 %v519
        %530 = vmatprep.subr.bf16.mxu0 0
        %531 = vmatpush1.bf16.msra.mxu0 %v518
        %532 = vmatprep.subr.bf16.mxu0 0
        %533 = vmatpush1.bf16.msra.mxu0 %v517
        %534 = vmatprep.subr.bf16.mxu0 0
        %535 = vmatpush1.bf16.msra.mxu0 %v516
        %536 = vmatprep.subr.bf16.mxu0 0
        %537 = vmatpush1.bf16.msra.mxu0 %v515
        %538 = vmatprep.subr.bf16.mxu0 0
        %539 = vmatpush1.bf16.msra.mxu0 %v514
        %540 = vmatprep.subr.bf16.mxu0 0
        %541 = vmatpush1.bf16.msra.mxu0 %v513
        %542 = vmatprep.subr.bf16.mxu0 0
        %543 = vmatpush1.bf16.msra.mxu0 %v512
        %544 = vmatprep.subr.bf16.mxu0 0
        %545 = vmatpush2.bf16.msra.mxu0 0
        %546 = vmatprep.subr.bf16.mxu0 0
        %547 = vmatpush2.bf16.msra.mxu0 0
        %548 = vmatprep.subr.bf16.mxu0 0
        %549 = vmatpush2.bf16.msra.mxu0 0
        %550 = vmatprep.subr.bf16.mxu0 0
        %551 = vmatpush2.bf16.msra.mxu0 0
        %552 = vmatprep.subr.bf16.mxu0 0
        %553 = vmatpush2.bf16.msra.mxu0 0
        %554 = vmatprep.subr.bf16.mxu0 0
        %555 = vmatpush2.bf16.msra.mxu0 0
        %556 = vmatprep.subr.bf16.mxu0 0
        %557 = vmatpush2.bf16.msra.mxu0 0
        %558 = vmatprep.subr.bf16.mxu0 0
        %559 = vmatpush2.bf16.msra.mxu0 0
        %560 = vmatprep.mubr.bf16.mxu0 0
        %561 = vmatmul.mubr.bf16.gmra.mxu0 %v456
        %v562 = vpop.f32.mrf.mxu0
        %v563 = vadd.f32 0.0, %v562
        %v564 = vpop.f32.mrf.mxu0
        %v565 = vpop.f32.mrf.mxu0
        %v566 = vadd.f32 0.0, %v565
        %v567 = vpop.f32.mrf.mxu0
        %568 = vmatprep.mubr.bf16.mxu0 0
        %569 = vmatmul.mubr.bf16.gmra.mxu0 %v457
        %v570 = vpop.f32.mrf.mxu0
        %v571 = vadd.f32 0.0, %v570
        %v572 = vpop.f32.mrf.mxu0
        %v573 = vpop.f32.mrf.mxu0
        %v574 = vadd.f32 0.0, %v573
        %v575 = vpop.f32.mrf.mxu0
        %576 = vmatprep.mubr.bf16.mxu0 0
        %577 = vmatmul.mubr.bf16.gmra.mxu0 %v458
        %v578 = vpop.f32.mrf.mxu0
        %v579 = vadd.f32 0.0, %v578
        %v580 = vpop.f32.mrf.mxu0
        %v581 = vpop.f32.mrf.mxu0
        %v582 = vadd.f32 0.0, %v581
        %v583 = vpop.f32.mrf.mxu0
        %584 = vmatprep.mubr.bf16.mxu0 0
        %585 = vmatmul.mubr.bf16.gmra.mxu0 %v459
        %v586 = vpop.f32.mrf.mxu0
        %v587 = vadd.f32 0.0, %v586
        %v588 = vpop.f32.mrf.mxu0
        %v589 = vpop.f32.mrf.mxu0
        %v590 = vadd.f32 0.0, %v589
        %v591 = vpop.f32.mrf.mxu0
        %592 = vmatprep.mubr.bf16.mxu0 0
        %593 = vmatmul.mubr.bf16.gmra.mxu0 %v460
        %v594 = vpop.f32.mrf.mxu0
        %v595 = vadd.f32 0.0, %v594
        %v596 = vpop.f32.mrf.mxu0
        %v597 = vpop.f32.mrf.mxu0
        %v598 = vadd.f32 0.0, %v597
        %v599 = vpop.f32.mrf.mxu0
        %600 = vmatprep.mubr.bf16.mxu0 0
        %601 = vmatmul.mubr.bf16.gmra.mxu0 %v461
        %v602 = vpop.f32.mrf.mxu0
        %v603 = vadd.f32 0.0, %v602
        %v604 = vpop.f32.mrf.mxu0
        %v605 = vpop.f32.mrf.mxu0
        %v606 = vadd.f32 0.0, %v605
        %v607 = vpop.f32.mrf.mxu0
        %608 = vmatprep.mubr.bf16.mxu0 0
        %609 = vmatmul.mubr.bf16.gmra.mxu0 %v462
        %v610 = vpop.f32.mrf.mxu0
        %v611 = vadd.f32 0.0, %v610
        %v612 = vpop.f32.mrf.mxu0
        %v613 = vpop.f32.mrf.mxu0
        %v614 = vadd.f32 0.0, %v613
        %v615 = vpop.f32.mrf.mxu0
        %616 = vmatprep.mubr.bf16.mxu0 0
        %617 = vmatmul.mubr.bf16.gmra.mxu0 %v463
        %v618 = vpop.f32.mrf.mxu0
        %v619 = vadd.f32 0.0, %v618
        %v620 = vpop.f32.mrf.mxu0
        %v621 = vpop.f32.mrf.mxu0
        %v622 = vadd.f32 0.0, %v621
        %v623 = vpop.f32.mrf.mxu0
        %624 = vdwg.mxu0
        %v625 = vpack.c.bf16 %v566, %v563
        %v626 = vpack.c.bf16 %v574, %v571
        %v627 = vpack.c.bf16 %v582, %v579
        %v628 = vpack.c.bf16 %v590, %v587
        %v629 = vpack.c.bf16 %v598, %v595
        %v630 = vpack.c.bf16 %v606, %v603
        %v631 = vpack.c.bf16 %v614, %v611
        %v632 = vpack.c.bf16 %v622, %v619
        %v633 = vld [vmem:[%s4] sm:$0x1]
        %v635 = vpack.i.b16 %v633, %v633
        %v637 = vlaneseq
        %v638 = vshrl.u32 %v637, 7
        %v639 = vsub.s32 0, %v638
        %v640 = vrot.slane %v635, %v639
        %v641 = vadd.bf16 %v625, %v640
        %v642 = vadd.bf16 %v626, %v640
        %v643 = vadd.bf16 %v627, %v640
        %v644 = vadd.bf16 %v628, %v640
        %v645 = vadd.bf16 %v629, %v640
        %v646 = vadd.bf16 %v630, %v640
        %v647 = vadd.bf16 %v631, %v640
        %v648 = vadd.bf16 %v632, %v640
        %v649 = vtanh.bf16.pop %v641
        %v650 = vtanh.bf16.pop %v642
        %v651 = vtanh.bf16.pop %v643
        %v652 = vtanh.bf16.pop %v644
        %v653 = vtanh.bf16.pop %v645
        %v654 = vtanh.bf16.pop %v646
        %v655 = vtanh.bf16.pop %v647
        %v656 = vtanh.bf16.pop %v648
        %s657 = scalar_lea.vmem %s3, 64
        %v658 = vld [vmem:[%s657] sm:$0xf]
        %v659 = vld [vmem:[%s657 + $0x4] sm:$0xf]
        %v660 = vld [vmem:[%s657 + $0x8] sm:$0xf]
        %v661 = vld [vmem:[%s657 + $0xc] sm:$0xf]
        %v662 = vld [vmem:[%s657 + $0x10] sm:$0xf]
        %v663 = vld [vmem:[%s657 + $0x14] sm:$0xf]
        %v664 = vld [vmem:[%s657 + $0x18] sm:$0xf]
        %v665 = vld [vmem:[%s657 + $0x1c] sm:$0xf]
        %v666 = vld [vmem:[%s657 + $0x20] sm:$0xf]
        %v667 = vld [vmem:[%s657 + $0x24] sm:$0xf]
        %v668 = vld [vmem:[%s657 + $0x28] sm:$0xf]
        %v669 = vld [vmem:[%s657 + $0x2c] sm:$0xf]
        %v670 = vld [vmem:[%s657 + $0x30] sm:$0xf]
        %v671 = vld [vmem:[%s657 + $0x34] sm:$0xf]
        %v672 = vld [vmem:[%s657 + $0x38] sm:$0xf]
        %v673 = vld [vmem:[%s657 + $0x3c] sm:$0xf]
        %v690 = vunpack.c.l.b16 %v658
        %v691 = vunpack.c.l.b16 %v659
        %v692 = vunpack.c.l.b16 %v660
        %v693 = vunpack.c.l.b16 %v661
        %v694 = vunpack.c.l.b16 %v662
        %v695 = vunpack.c.l.b16 %v663
        %v696 = vunpack.c.l.b16 %v664
        %v697 = vunpack.c.l.b16 %v665
        %v698 = vunpack.c.l.b16 %v666
        %v699 = vunpack.c.l.b16 %v667
        %v700 = vunpack.c.l.b16 %v668
        %v701 = vunpack.c.l.b16 %v669
        %v702 = vunpack.c.l.b16 %v670
        %v703 = vunpack.c.l.b16 %v671
        %v704 = vunpack.c.l.b16 %v672
        %v705 = vunpack.c.l.b16 %v673
        %v706 = vpack.c.b16 %v691, %v690
        %v707 = vpack.c.b16 %v693, %v692
        %v708 = vpack.c.b16 %v695, %v694
        %v709 = vpack.c.b16 %v697, %v696
        %v710 = vpack.c.b16 %v699, %v698
        %v711 = vpack.c.b16 %v701, %v700
        %v712 = vpack.c.b16 %v703, %v702
        %v713 = vpack.c.b16 %v705, %v704
        %722 = vmatprep.subr.bf16.mxu0 0
        %723 = vmatpush1.bf16.msra.mxu0 %v713
        %724 = vmatprep.subr.bf16.mxu0 0
        %725 = vmatpush1.bf16.msra.mxu0 %v712
        %726 = vmatprep.subr.bf16.mxu0 0
        %727 = vmatpush1.bf16.msra.mxu0 %v711
        %728 = vmatprep.subr.bf16.mxu0 0
        %729 = vmatpush1.bf16.msra.mxu0 %v710
        %730 = vmatprep.subr.bf16.mxu0 0
        %731 = vmatpush1.bf16.msra.mxu0 %v709
        %732 = vmatprep.subr.bf16.mxu0 0
        %733 = vmatpush1.bf16.msra.mxu0 %v708
        %734 = vmatprep.subr.bf16.mxu0 0
        %735 = vmatpush1.bf16.msra.mxu0 %v707
        %736 = vmatprep.subr.bf16.mxu0 0
        %737 = vmatpush1.bf16.msra.mxu0 %v706
        %738 = vmatprep.subr.bf16.mxu0 0
        %739 = vmatpush2.bf16.msra.mxu0 0
        %740 = vmatprep.subr.bf16.mxu0 0
        %741 = vmatpush2.bf16.msra.mxu0 0
        %742 = vmatprep.subr.bf16.mxu0 0
        %743 = vmatpush2.bf16.msra.mxu0 0
        %744 = vmatprep.subr.bf16.mxu0 0
        %745 = vmatpush2.bf16.msra.mxu0 0
        %746 = vmatprep.subr.bf16.mxu0 0
        %747 = vmatpush2.bf16.msra.mxu0 0
        %748 = vmatprep.subr.bf16.mxu0 0
        %749 = vmatpush2.bf16.msra.mxu0 0
        %750 = vmatprep.subr.bf16.mxu0 0
        %751 = vmatpush2.bf16.msra.mxu0 0
        %752 = vmatprep.subr.bf16.mxu0 0
        %753 = vmatpush2.bf16.msra.mxu0 0
        %754 = vmatprep.mubr.bf16.mxu0 0
        %755 = vmatmul.mubr.bf16.gmra.mxu0 %v649
        %v756 = vpop.f32.mrf.mxu0
        %v757 = vadd.f32 0.0, %v756
        %v758 = vpop.f32.mrf.mxu0
        %v759 = vpop.f32.mrf.mxu0
        %v760 = vadd.f32 0.0, %v759
        %v761 = vpop.f32.mrf.mxu0
        %762 = vmatprep.mubr.bf16.mxu0 0
        %763 = vmatmul.mubr.bf16.gmra.mxu0 %v650
        %v764 = vpop.f32.mrf.mxu0
        %v765 = vadd.f32 0.0, %v764
        %v766 = vpop.f32.mrf.mxu0
        %v767 = vpop.f32.mrf.mxu0
        %v768 = vadd.f32 0.0, %v767
        %v769 = vpop.f32.mrf.mxu0
        %770 = vmatprep.mubr.bf16.mxu0 0
        %771 = vmatmul.mubr.bf16.gmra.mxu0 %v651
        %v772 = vpop.f32.mrf.mxu0
        %v773 = vadd.f32 0.0, %v772
        %v774 = vpop.f32.mrf.mxu0
        %v775 = vpop.f32.mrf.mxu0
        %v776 = vadd.f32 0.0, %v775
        %v777 = vpop.f32.mrf.mxu0
        %778 = vmatprep.mubr.bf16.mxu0 0
        %779 = vmatmul.mubr.bf16.gmra.mxu0 %v652
        %v780 = vpop.f32.mrf.mxu0
        %v781 = vadd.f32 0.0, %v780
        %v782 = vpop.f32.mrf.mxu0
        %v783 = vpop.f32.mrf.mxu0
        %v784 = vadd.f32 0.0, %v783
        %v785 = vpop.f32.mrf.mxu0
        %786 = vmatprep.mubr.bf16.mxu0 0
        %787 = vmatmul.mubr.bf16.gmra.mxu0 %v653
        %v788 = vpop.f32.mrf.mxu0
        %v789 = vadd.f32 0.0, %v788
        %v790 = vpop.f32.mrf.mxu0
        %v791 = vpop.f32.mrf.mxu0
        %v792 = vadd.f32 0.0, %v791
        %v793 = vpop.f32.mrf.mxu0
        %794 = vmatprep.mubr.bf16.mxu0 0
        %795 = vmatmul.mubr.bf16.gmra.mxu0 %v654
        %v796 = vpop.f32.mrf.mxu0
        %v797 = vadd.f32 0.0, %v796
        %v798 = vpop.f32.mrf.mxu0
        %v799 = vpop.f32.mrf.mxu0
        %v800 = vadd.f32 0.0, %v799
        %v801 = vpop.f32.mrf.mxu0
        %802 = vmatprep.mubr.bf16.mxu0 0
        %803 = vmatmul.mubr.bf16.gmra.mxu0 %v655
        %v804 = vpop.f32.mrf.mxu0
        %v805 = vadd.f32 0.0, %v804
        %v806 = vpop.f32.mrf.mxu0
        %v807 = vpop.f32.mrf.mxu0
        %v808 = vadd.f32 0.0, %v807
        %v809 = vpop.f32.mrf.mxu0
        %810 = vmatprep.mubr.bf16.mxu0 0
        %811 = vmatmul.mubr.bf16.gmra.mxu0 %v656
        %v812 = vpop.f32.mrf.mxu0
        %v813 = vadd.f32 0.0, %v812
        %v814 = vpop.f32.mrf.mxu0
        %v815 = vpop.f32.mrf.mxu0
        %v816 = vadd.f32 0.0, %v815
        %v817 = vpop.f32.mrf.mxu0
        %818 = vdwg.mxu0
        %v819 = vpack.c.bf16 %v760, %v757
        %v820 = vpack.c.bf16 %v768, %v765
        %v821 = vpack.c.bf16 %v776, %v773
        %v822 = vpack.c.bf16 %v784, %v781
        %v823 = vpack.c.bf16 %v792, %v789
        %v824 = vpack.c.bf16 %v800, %v797
        %v825 = vpack.c.bf16 %v808, %v805
        %v826 = vpack.c.bf16 %v816, %v813
        %s827 = scalar_lea.vmem %s4, 1
        %v828 = vld [vmem:[%s827] sm:$0x1]
        %v830 = vpack.i.b16 %v828, %v828
        %v832 = vlaneseq
        %v833 = vshrl.u32 %v832, 7
        %v834 = vsub.s32 0, %v833
        %v835 = vrot.slane %v830, %v834
        %v836 = vadd.bf16 %v819, %v835
        %v837 = vadd.bf16 %v820, %v835
        %v838 = vadd.bf16 %v821, %v835
        %v839 = vadd.bf16 %v822, %v835
        %v840 = vadd.bf16 %v823, %v835
        %v841 = vadd.bf16 %v824, %v835
        %v842 = vadd.bf16 %v825, %v835
        %v843 = vadd.bf16 %v826, %v835
        %v844 = vtanh.bf16.pop %v836
        %v845 = vtanh.bf16.pop %v837
        %v846 = vtanh.bf16.pop %v838
        %v847 = vtanh.bf16.pop %v839
        %v848 = vtanh.bf16.pop %v840
        %v849 = vtanh.bf16.pop %v841
        %v850 = vtanh.bf16.pop %v842
        %v851 = vtanh.bf16.pop %v843
        %v852 = vld [vmem:[%s5] sm:$0xf]
        %v853 = vld [vmem:[%s5 + $0x4] sm:$0xf]
        %v854 = vld [vmem:[%s5 + $0x8] sm:$0xf]
        %v855 = vld [vmem:[%s5 + $0xc] sm:$0xf]
        %v856 = vld [vmem:[%s5 + $0x10] sm:$0xf]
        %v857 = vld [vmem:[%s5 + $0x14] sm:$0xf]
        %v858 = vld [vmem:[%s5 + $0x18] sm:$0xf]
        %v859 = vld [vmem:[%s5 + $0x1c] sm:$0xf]
        %v860 = vld [vmem:[%s5 + $0x20] sm:$0xf]
        %v861 = vld [vmem:[%s5 + $0x24] sm:$0xf]
        %v862 = vld [vmem:[%s5 + $0x28] sm:$0xf]
        %v863 = vld [vmem:[%s5 + $0x2c] sm:$0xf]
        %v864 = vld [vmem:[%s5 + $0x30] sm:$0xf]
        %v865 = vld [vmem:[%s5 + $0x34] sm:$0xf]
        %v866 = vld [vmem:[%s5 + $0x38] sm:$0xf]
        %v867 = vld [vmem:[%s5 + $0x3c] sm:$0xf]
        %v868 = vld [vmem:[%s6] sm:$0x1]
        %v870 = vlaneseq
        %v871 = vshrl.u32 %v870, 7
        %v872 = vsub.s32 0, %v871
        %v873 = vrot.slane %v868, %v872
        %v891 = vunpack.c.l.b16 %v852
        %v892 = vunpack.c.l.b16 %v853
        %v893 = vunpack.c.l.b16 %v854
        %v894 = vunpack.c.l.b16 %v855
        %v895 = vunpack.c.l.b16 %v856
        %v896 = vunpack.c.l.b16 %v857
        %v897 = vunpack.c.l.b16 %v858
        %v898 = vunpack.c.l.b16 %v859
        %v899 = vunpack.c.l.b16 %v860
        %v900 = vunpack.c.l.b16 %v861
        %v901 = vunpack.c.l.b16 %v862
        %v902 = vunpack.c.l.b16 %v863
        %v903 = vunpack.c.l.b16 %v864
        %v904 = vunpack.c.l.b16 %v865
        %v905 = vunpack.c.l.b16 %v866
        %v906 = vunpack.c.l.b16 %v867
        %v907 = vpack.c.b16 %v892, %v891
        %v908 = vpack.c.b16 %v894, %v893
        %v909 = vpack.c.b16 %v896, %v895
        %v910 = vpack.c.b16 %v898, %v897
        %v911 = vpack.c.b16 %v900, %v899
        %v912 = vpack.c.b16 %v902, %v901
        %v913 = vpack.c.b16 %v904, %v903
        %v914 = vpack.c.b16 %v906, %v905
        %923 = vmatprep.subr.bf16.mxu0 0
        %924 = vmatpush1.bf16.msra.mxu0 %v914
        %925 = vmatprep.subr.bf16.mxu0 0
        %926 = vmatpush1.bf16.msra.mxu0 %v913
        %927 = vmatprep.subr.bf16.mxu0 0
        %928 = vmatpush1.bf16.msra.mxu0 %v912
        %929 = vmatprep.subr.bf16.mxu0 0
        %930 = vmatpush1.bf16.msra.mxu0 %v911
        %931 = vmatprep.subr.bf16.mxu0 0
        %932 = vmatpush1.bf16.msra.mxu0 %v910
        %933 = vmatprep.subr.bf16.mxu0 0
        %934 = vmatpush1.bf16.msra.mxu0 %v909
        %935 = vmatprep.subr.bf16.mxu0 0
        %936 = vmatpush1.bf16.msra.mxu0 %v908
        %937 = vmatprep.subr.bf16.mxu0 0
        %938 = vmatpush1.bf16.msra.mxu0 %v907
        %939 = vmatprep.subr.bf16.mxu0 0
        %940 = vmatpush2.bf16.msra.mxu0 0
        %941 = vmatprep.subr.bf16.mxu0 0
        %942 = vmatpush2.bf16.msra.mxu0 0
        %943 = vmatprep.subr.bf16.mxu0 0
        %944 = vmatpush2.bf16.msra.mxu0 0
        %945 = vmatprep.subr.bf16.mxu0 0
        %946 = vmatpush2.bf16.msra.mxu0 0
        %947 = vmatprep.subr.bf16.mxu0 0
        %948 = vmatpush2.bf16.msra.mxu0 0
        %949 = vmatprep.subr.bf16.mxu0 0
        %950 = vmatpush2.bf16.msra.mxu0 0
        %951 = vmatprep.subr.bf16.mxu0 0
        %952 = vmatpush2.bf16.msra.mxu0 0
        %953 = vmatprep.subr.bf16.mxu0 0
        %954 = vmatpush2.bf16.msra.mxu0 0
        %955 = vmatprep.mubr.bf16.mxu0 0
        %956 = vmatmul.mubr.bf16.gmra.mxu0 %v844
        %v957 = vpop.f32.mrf.mxu0
        %v958 = vadd.f32 %v873, %v957
        %v959 = vpop.f32.mrf.mxu0
        %v960 = vpop.f32.mrf.mxu0
        %v961 = vadd.f32 %v873, %v960
        %v962 = vpop.f32.mrf.mxu0
        %963 = vmatprep.mubr.bf16.mxu0 0
        %964 = vmatmul.mubr.bf16.gmra.mxu0 %v845
        %v965 = vpop.f32.mrf.mxu0
        %v966 = vadd.f32 %v873, %v965
        %v967 = vpop.f32.mrf.mxu0
        %v968 = vpop.f32.mrf.mxu0
        %v969 = vadd.f32 %v873, %v968
        %v970 = vpop.f32.mrf.mxu0
        %971 = vmatprep.mubr.bf16.mxu0 0
        %972 = vmatmul.mubr.bf16.gmra.mxu0 %v846
        %v973 = vpop.f32.mrf.mxu0
        %v974 = vadd.f32 %v873, %v973
        %v975 = vpop.f32.mrf.mxu0
        %v976 = vpop.f32.mrf.mxu0
        %v977 = vadd.f32 %v873, %v976
        %v978 = vpop.f32.mrf.mxu0
        %979 = vmatprep.mubr.bf16.mxu0 0
        %980 = vmatmul.mubr.bf16.gmra.mxu0 %v847
        %v981 = vpop.f32.mrf.mxu0
        %v982 = vadd.f32 %v873, %v981
        %v983 = vpop.f32.mrf.mxu0
        %v984 = vpop.f32.mrf.mxu0
        %v985 = vadd.f32 %v873, %v984
        %v986 = vpop.f32.mrf.mxu0
        %987 = vmatprep.mubr.bf16.mxu0 0
        %988 = vmatmul.mubr.bf16.gmra.mxu0 %v848
        %v989 = vpop.f32.mrf.mxu0
        %v990 = vadd.f32 %v873, %v989
        %v991 = vpop.f32.mrf.mxu0
        %v992 = vpop.f32.mrf.mxu0
        %v993 = vadd.f32 %v873, %v992
        %v994 = vpop.f32.mrf.mxu0
        %995 = vmatprep.mubr.bf16.mxu0 0
        %996 = vmatmul.mubr.bf16.gmra.mxu0 %v849
        %v997 = vpop.f32.mrf.mxu0
        %v998 = vadd.f32 %v873, %v997
        %v999 = vpop.f32.mrf.mxu0
        %v1000 = vpop.f32.mrf.mxu0
        %v1001 = vadd.f32 %v873, %v1000
        %v1002 = vpop.f32.mrf.mxu0
        %1003 = vmatprep.mubr.bf16.mxu0 0
        %1004 = vmatmul.mubr.bf16.gmra.mxu0 %v850
        %v1005 = vpop.f32.mrf.mxu0
        %v1006 = vadd.f32 %v873, %v1005
        %v1007 = vpop.f32.mrf.mxu0
        %v1008 = vpop.f32.mrf.mxu0
        %v1009 = vadd.f32 %v873, %v1008
        %v1010 = vpop.f32.mrf.mxu0
        %1011 = vmatprep.mubr.bf16.mxu0 0
        %1012 = vmatmul.mubr.bf16.gmra.mxu0 %v851
        %v1013 = vpop.f32.mrf.mxu0
        %v1014 = vadd.f32 %v873, %v1013
        %v1015 = vpop.f32.mrf.mxu0
        %v1016 = vpop.f32.mrf.mxu0
        %v1017 = vadd.f32 %v873, %v1016
        %v1018 = vpop.f32.mrf.mxu0
        %1019 = vdwg.mxu0
        %v1020 = vpack.c.bf16 %v961, %v958
        %v1021 = vpack.c.bf16 %v969, %v966
        %v1022 = vpack.c.bf16 %v977, %v974
        %v1023 = vpack.c.bf16 %v985, %v982
        %v1024 = vpack.c.bf16 %v993, %v990
        %v1025 = vpack.c.bf16 %v1001, %v998
        %v1026 = vpack.c.bf16 %v1009, %v1006
        %v1027 = vpack.c.bf16 %v1017, %v1014
        %v1036 = vunpack.c.l.b16 %v1020
        %v1037 = vunpack.c.h.b16 %v1020
        %v1038 = vunpack.c.l.b16 %v1021
        %v1039 = vunpack.c.h.b16 %v1021
        %v1040 = vunpack.c.l.b16 %v1022
        %v1041 = vunpack.c.h.b16 %v1022
        %v1042 = vunpack.c.l.b16 %v1023
        %v1043 = vunpack.c.h.b16 %v1023
        %v1044 = vunpack.c.l.b16 %v1024
        %v1045 = vunpack.c.h.b16 %v1024
        %v1046 = vunpack.c.l.b16 %v1025
        %v1047 = vunpack.c.h.b16 %v1025
        %v1048 = vunpack.c.l.b16 %v1026
        %v1049 = vunpack.c.h.b16 %v1026
        %v1050 = vunpack.c.l.b16 %v1027
        %v1051 = vunpack.c.h.b16 %v1027
        %v1052 = vpack.c.b16 %v1036, %v1036
        %v1053 = vpack.c.b16 %v1037, %v1037
        %v1054 = vpack.c.b16 %v1038, %v1038
        %v1055 = vpack.c.b16 %v1039, %v1039
        %v1056 = vpack.c.b16 %v1040, %v1040
        %v1057 = vpack.c.b16 %v1041, %v1041
        %v1058 = vpack.c.b16 %v1042, %v1042
        %v1059 = vpack.c.b16 %v1043, %v1043
        %v1060 = vpack.c.b16 %v1044, %v1044
        %v1061 = vpack.c.b16 %v1045, %v1045
        %v1062 = vpack.c.b16 %v1046, %v1046
        %v1063 = vpack.c.b16 %v1047, %v1047
        %v1064 = vpack.c.b16 %v1048, %v1048
        %v1065 = vpack.c.b16 %v1049, %v1049
        %v1066 = vpack.c.b16 %v1050, %v1050
        %v1067 = vpack.c.b16 %v1051, %v1051
        %1084 = vst [vmem:[%s272] sm:$0xf] %v1052
        %1085 = vst [vmem:[%s272 + $0x4] sm:$0xf] %v1053
        %1086 = vst [vmem:[%s272 + $0x8] sm:$0xf] %v1054
        %1087 = vst [vmem:[%s272 + $0xc] sm:$0xf] %v1055
        %1088 = vst [vmem:[%s272 + $0x10] sm:$0xf] %v1056
        %1089 = vst [vmem:[%s272 + $0x14] sm:$0xf] %v1057
        %1090 = vst [vmem:[%s272 + $0x18] sm:$0xf] %v1058
        %1091 = vst [vmem:[%s272 + $0x1c] sm:$0xf] %v1059
        %1092 = vst [vmem:[%s272 + $0x20] sm:$0xf] %v1060
        %1093 = vst [vmem:[%s272 + $0x24] sm:$0xf] %v1061
        %1094 = vst [vmem:[%s272 + $0x28] sm:$0xf] %v1062
        %1095 = vst [vmem:[%s272 + $0x2c] sm:$0xf] %v1063
        %1096 = vst [vmem:[%s272 + $0x30] sm:$0xf] %v1064
        %1097 = vst [vmem:[%s272 + $0x34] sm:$0xf] %v1065
        %1098 = vst [vmem:[%s272 + $0x38] sm:$0xf] %v1066
        %1099 = vst [vmem:[%s272 + $0x3c] sm:$0xf] %v1067
        %s1100 = sand.u32 %s181, 1
        %s1101 = scalar_lea.sflag [#allocation3], %s1100
        %s1102 = sand.u32 %s181, 1
        %s1103 = smul.addr %s1102, 64
        %s1104 = scalar_lea.vmem [#allocation2], %s1103
        // Predicated region
        $region49: #{tpu_custom_call.1} parent=47 // pred_check
          %p1105 = pneg %p191
        $region50: #{tpu_custom_call.1} parent=47 // pred_check_branch
          %1107 = sbr.rel (%p1105) target = $region52
        $region51: #{tpu_custom_call.1} parent=47 // pred_region
          %s1108 = smul.u32 16, %s21
          %s1110 = ssub.s32 1024, 1024
          %1111 = vsyncadd %s1101, %s1110
          %s1112 = smul.addr %s1108, 64
          %s1113 = scalar_lea.hbm %s7, %s1112
          %s1114 = sshll.u32 %s1104, 4
          %s1115 = int_to_ptr.vmem [resolvable:$true] %s1114
          %1120 = dma.vmem_to_hbm [thread:$0]  %s1115, 1024, %s1113, %s1101, 64, 64, 4
        $region52: #{tpu_custom_call.1} parent=47 // pred_fallthru
          _
      $region48: #{tpu_custom_call.1} parent=5 // pred_fallthru
        _
      %p1121 = scmp.le.s32.totalorder 2, %s16
      // Predicated region
      $region53: #{tpu_custom_call.1} parent=5 // pred_check
        %p1122 = pneg %p1121
      $region54: #{tpu_custom_call.1} parent=5 // pred_check_branch
        %1124 = sbr.rel (%p1122) target = $region56
      $region55: #{tpu_custom_call.1} parent=5 // pred_region
        %s1125 = ssub.s32 %s16, 2
        // Predicated region
        $region57: #{tpu_custom_call.1} parent=55 // pred_check
          %p1126 = pneg %p197
        $region58: #{tpu_custom_call.1} parent=55 // pred_check_branch
          %1128 = sbr.rel (%p1126) target = $region60
        $region59: #{tpu_custom_call.1} parent=55 // pred_region
          %s1129 = sand.u32 %s182, 1
          %s1130 = scalar_lea.sflag [#allocation3], %s1129
          %s1131 = sand.u32 %s182, 1
          %s1132 = smul.addr %s1131, 64
          %s1133 = scalar_lea.vmem [#allocation2], %s1132
          %1134 = dma.done %s1130, 1024
        $region60: #{tpu_custom_call.1} parent=55 // pred_fallthru
          _
      $region56: #{tpu_custom_call.1} parent=5 // pred_fallthru
        _
    $region6: #{tpu_custom_call.1} parent=1 // loop_footer
      %s20 = sadd.s32 1, %s16
    $region7: #{tpu_custom_call.1} parent=1 // loop_footer_branch
      %15 = sbr.rel target = $region3
    $region8: #{tpu_custom_call.1} parent=1 // loop_exit
      _
    %1135 = vsyncpa [#allocation3], 1
    %s1136 = scalar_lea.sflag [#allocation3], 1
    %1137 = vsyncpa %s1136, 1

</llo_original>
